<compile_context>
chip_gen: v7x
topology: tpu7x:2x2x1
jax: 0.10.0
libtpu: 0.0.40
codegen_flags: <defaults>
</compile_context>

<pallas_src>
import numpy as np
import jax
import jax.numpy as jnp
from jax.experimental import pallas as pl
from jax.experimental.pallas import tpu as pltpu


# ----------------------------- Pallas kernel --------------------------------

def _crop_view_kernel(x_ref, wy_ref, wxt_ref, o_ref):
    """Resample B image planes into (S, S) crops for a single view.

    x_ref:   (B, H, W)       f32  batch of image planes (shared by both views)
    wy_ref:  (1, S, H)       f32  this view's row-sampling matrix
    wxt_ref: (1, W, S)       f32  this view's column-sampling matrix (transposed)
    o_ref:   (1, 1, B*S, S)  f32  rows packed as b*S + s  (final memory layout)
    """
    B, H, W = x_ref.shape
    S = wxt_ref.shape[2]

    # bf16 feeds the MXU natively on v6e/v7x; f32 accumulation below.
    img = x_ref[...].astype(jnp.bfloat16).reshape(B * H, W)        # (B*H, W)
    wxt = wxt_ref[0].astype(jnp.bfloat16)                          # (W, S)
    wy = wy_ref[0].astype(jnp.bfloat16)                            # (S, H)

    # Stage 1: resample along x for all planes in ONE MXU matmul (M = B*H).
    tmp = jnp.dot(img, wxt, preferred_element_type=jnp.float32)    # (B*H, S)
    tmp = tmp.astype(jnp.bfloat16)

    # Stage 2: resample along y.  Static per-plane loop; wy is reused without
    # materializing any (B, S, H) broadcast, all slices are static, and every
    # (S, S) block lands directly at its final row offset b*S.
    for b in range(B):
        blk = jnp.dot(wy, tmp[b * H:(b + 1) * H, :],
                      preferred_element_type=jnp.float32)          # (S, S)
        o_ref[0, 0, b * S:(b + 1) * S, :] = blk


# ----------------------------- block sizing ---------------------------------

def _vmem_capacity_bytes():
    try:
        return int(pltpu.get_tpu_info().vmem_capacity_bytes)
    except Exception:
        return 64 * 1024 * 1024          # conservative (v7x-sized) fallback


def _choose_block_planes(NC, H, W, S, vmem_capacity):
    """Largest divisor of NC whose per-step VMEM footprint fits the budget.

    Counts: double-buffered f32 input block (8*H*W per plane), bf16 image copy
    (2*H*W), f32 + bf16 stage-1 intermediate (6*H*S), double-buffered f32
    output block (8*S*S), plus fixed double-buffered weights and their bf16
    copies.  v7x (64 MiB physical VMEM) automatically gets ~half the budget of
    v5e/v6e (128 MiB).  Choosing a divisor of NC avoids any input padding.
    """
    budget = (3 * vmem_capacity) // 8
    fixed = 10 * S * (H + W)
    per_plane = 10 * H * W + 6 * H * S + 8 * S * S
    b_max = max(1, (budget - fixed) // per_plane)
    b = 1
    for d in range(1, NC + 1):
        if NC % d == 0 and d <= b_max:
            b = d
    return int(b)


# ------------------------------- wrapper -------------------------------------

def data_augmentation_pallas(x, wy, wxt, block_planes=None):
    """x: (N, C, H, W) f32; wy: (2, S, H); wxt: (2, W, S).

    Returns (view1, view2), each (N, C, S, S) f32.
    """
    N, C, H, W = x.shape
    S = wy.shape[1]
    NC = N * C

    vmem_capacity = _vmem_capacity_bytes()
    B = (block_planes if block_planes is not None
         else _choose_block_planes(NC, H, W, S, vmem_capacity))
    assert NC % B == 0, "block_planes must divide N*C"
    G = NC // B

    xf = x.reshape(NC, H, W)            # pure reshape, no data movement

    out = pl.pallas_call(
        _crop_view_kernel,
        out_shape=jax.ShapeDtypeStruct((2, G, B * S, S), jnp.float32),
        grid=(G, 2),                    # (plane blocks, views)
        in_specs=[
            # x's block index ignores the view axis: between (g, 0) and (g, 1)
            # the block is unchanged, so each plane block is DMA'd once.
            pl.BlockSpec((B, H, W), lambda g, v: (g, 0, 0)),
            pl.BlockSpec((1, S, H), lambda g, v: (v, 0, 0)),
            pl.BlockSpec((1, W, S), lambda g, v: (v, 0, 0)),
        ],
        out_specs=pl.BlockSpec((1, 1, B * S, S), lambda g, v: (v, g, 0, 0)),
        compiler_params=pltpu.CompilerParams(
            dimension_semantics=("parallel", "parallel"),
            vmem_limit_bytes=int(vmem_capacity // 2),
        ),
    )(xf, wy, wxt)

    # (2, G, B*S, S) and (2, G*B, S, S) share the same contiguous row-major
    # layout -> this reshape is free (no extra HBM pass, unlike a transpose).
    out = out.reshape(2, N, C, S, S)
    return out[0], out[1]


# ------------------------------ glue (host) ---------------------------------

def _bilinear_matrix(offset, crop_len, in_len, out_len):
    """(out_len, in_len) matrix: crop [offset, offset+crop_len) + bilinear resize.

    `hi` is clamped to in_len-1 rather than offset+crop_len-1; this is benign
    because frac == 0 exactly at the clamped upper boundary (src is clipped to
    crop_len-1 first), so the out-of-crop column gets weight 0.
    """
    o = np.arange(out_len, dtype=np.float64)
    src = (o + 0.5) * (crop_len / out_len) - 0.5          # align_corners=False
    src = np.clip(src, 0.0, crop_len - 1.0) + offset      # clamp inside crop
    lo = np.floor(src).astype(np.int64)
    hi = np.minimum(lo + 1, in_len - 1)
    frac = (src - lo).astype(np.float32)
    M = np.zeros((out_len, in_len), dtype=np.float32)
    M[np.arange(out_len), lo] += (1.0 - frac)
    M[np.arange(out_len), hi] += frac
    return M


def _random_resized_crop_params(rng, H, W, scale=(0.08, 1.0), ratio=(3.0 / 4.0, 4.0 / 3.0)):
    """Mirror of torchvision RandomResizedCrop.get_params (host-side randomness)."""
    area = H * W
    log_ratio = (np.log(ratio[0]), np.log(ratio[1]))
    for _ in range(10):
        target_area = area * rng.uniform(scale[0], scale[1])
        aspect = np.exp(rng.uniform(log_ratio[0], log_ratio[1]))
        w = int(round(np.sqrt(target_area * aspect)))
        h = int(round(np.sqrt(target_area / aspect)))
        if 0 < w <= W and 0 < h <= H:
            i = int(rng.integers(0, H - h + 1))
            j = int(rng.integers(0, W - w + 1))
            return i, j, h, w
    # fallback: center crop
    in_ratio = W / H
    if in_ratio < ratio[0]:
        w = W
        h = int(round(w / ratio[0]))
    elif in_ratio > ratio[1]:
        h = H
        w = int(round(h * ratio[1]))
    else:
        w, h = W, H
    return (H - h) // 2, (W - w) // 2, h, w


def data_augmentation(x, size, seed=0, block_planes=None):
    """Forward pass of DataAugmentation: two independently cropped views."""
    _, _, H, W = x.shape
    rng = np.random.default_rng(seed)
    wys, wxts = [], []
    for _ in range(2):
        i, j, h, w = _random_resized_crop_params(rng, H, W)
        wys.append(_bilinear_matrix(i, h, H, size))          # (S, H)
        wxts.append(_bilinear_matrix(j, w, W, size).T)       # (W, S)
    wy = jnp.asarray(np.stack(wys))                          # (2, S, H)
    wxt = jnp.asarray(np.stack(wxts))                        # (2, W, S)
    return data_augmentation_pallas(x, wy, wxt, block_planes=block_planes), (wy, wxt)


# --------------------------------- main --------------------------------------

if __name__ == "__main__":
    key = jax.random.PRNGKey(0)
    N, C, H, W = 2, 4, 16, 16
    size = 8

    x = jax.random.normal(key, (N, C, H, W), dtype=jnp.float32)

    (out1, out2), (wy, wxt) = data_augmentation(x, size, seed=0)
    jax.block_until_ready((out1, out2))

    assert out1.shape == (N, C, size, size)
    assert out2.shape == (N, C, size, size)
    assert out1.dtype == jnp.float32 and out2.dtype == jnp.float32

    # Numerical sanity check against a pure-JAX separable-bilinear reference
    # (loose tolerance: kernel feeds the MXU bf16 operands with f32 accumulate).
    xf = x.reshape(N * C, H, W)
    for v, out_v in enumerate((out1, out2)):
        ref = jnp.einsum('sh,phw,wk->psk', wy[v], xf, wxt[v]).reshape(N, C, size, size)
        np.testing.assert_allclose(np.asarray(out_v), np.asarray(ref),
                                   rtol=2e-2, atol=5e-2)

    # Exercise the multi-block path (G > 1) to validate the grid index maps.
    (m1, m2), _ = data_augmentation(x, size, seed=0, block_planes=2)
    jax.block_until_ready((m1, m2))
    np.testing.assert_allclose(np.asarray(m1), np.asarray(out1), rtol=1e-6, atol=1e-6)
    np.testing.assert_allclose(np.asarray(m2), np.asarray(out2), rtol=1e-6, atol=1e-6)

    print("KERNEL_OK")
</pallas_src>

<mosaic_0001>
module attributes {stable_mosaic.version = 11 : i64} {
  func.func @_crop_view_kernel(%arg0: i32, %arg1: i32, %arg2: memref<8x16x16xf32, #tpu.memory_space<vmem>>, %arg3: memref<1x8x16xf32, #tpu.memory_space<vmem>>, %arg4: memref<1x16x8xf32, #tpu.memory_space<vmem>>, %arg5: memref<1x1x64x8xf32, #tpu.memory_space<vmem>>) attributes {dimension_semantics = [#tpu.dimension_semantics<parallel>, #tpu.dimension_semantics<parallel>], iteration_bounds = array<i64: 1, 2>, scalar_prefetch = 0 : i64, scratch_operands = 0 : i64, tpu.core_type = #tpu.core_type<tc>, window_params = [{transform_indices = @transform_0, window_bounds = array<i64: 8, 16, 16>}, {transform_indices = @transform_1, window_bounds = array<i64: 1, 8, 16>}, {transform_indices = @transform_2, window_bounds = array<i64: 1, 16, 8>}, {transform_indices = @transform_3, window_bounds = array<i64: 1, 1, 64, 8>}]} {
    %c0 = arith.constant 0 : index
    %c0_0 = arith.constant 0 : index
    %c0_1 = arith.constant 0 : index
    %0 = vector.load %arg2[%c0, %c0_0, %c0_1] : memref<8x16x16xf32, #tpu.memory_space<vmem>>, vector<8x16x16xf32>
    %1 = arith.truncf %0 : vector<8x16x16xf32> to vector<8x16x16xbf16>
    %2 = vector.shape_cast %1 : vector<8x16x16xbf16> to vector<128x16xbf16>
    %c0_2 = arith.constant 0 : index
    %c0_3 = arith.constant 0 : index
    %c0_4 = arith.constant 0 : index
    %3 = vector.load %arg4[%c0_2, %c0_3, %c0_4] : memref<1x16x8xf32, #tpu.memory_space<vmem>>, vector<1x16x8xf32>
    %4 = vector.shape_cast %3 : vector<1x16x8xf32> to vector<16x8xf32>
    %5 = arith.truncf %4 : vector<16x8xf32> to vector<16x8xbf16>
    %c0_5 = arith.constant 0 : index
    %c0_6 = arith.constant 0 : index
    %c0_7 = arith.constant 0 : index
    %6 = vector.load %arg3[%c0_5, %c0_6, %c0_7] : memref<1x8x16xf32, #tpu.memory_space<vmem>>, vector<1x8x16xf32>
    %7 = vector.shape_cast %6 : vector<1x8x16xf32> to vector<8x16xf32>
    %8 = arith.truncf %7 : vector<8x16xf32> to vector<8x16xbf16>
    %cst = arith.constant dense<0.000000e+00> : vector<128x8xf32>
    %9 = tpu.matmul %2, %5, %cst {dimension_numbers = #tpu.dot_dimension_numbers<[1], [0], [0], [1], [0, 0, 1, 1], [], []>} : vector<128x16xbf16>, vector<16x8xbf16>, vector<128x8xf32> -> vector<128x8xf32>
    %10 = arith.truncf %9 : vector<128x8xf32> to vector<128x8xbf16>
    %11 = vector.extract_strided_slice %10 {offsets = [0, 0], sizes = [16, 8], strides = [1, 1]} : vector<128x8xbf16> to vector<16x8xbf16>
    %cst_8 = arith.constant dense<0.000000e+00> : vector<8x8xf32>
    %12 = tpu.matmul %8, %11, %cst_8 {dimension_numbers = #tpu.dot_dimension_numbers<[1], [0], [0], [1], [0, 0, 1, 1], [], []>} : vector<8x16xbf16>, vector<16x8xbf16>, vector<8x8xf32> -> vector<8x8xf32>
    %c0_9 = arith.constant 0 : index
    %c0_10 = arith.constant 0 : index
    %c0_11 = arith.constant 0 : index
    %c0_12 = arith.constant 0 : index
    %13 = vector.load %arg5[%c0_9, %c0_10, %c0_11, %c0_12] : memref<1x1x64x8xf32, #tpu.memory_space<vmem>>, vector<1x1x8x8xf32>
    %14 = vector.shape_cast %13 : vector<1x1x8x8xf32> to vector<8x8xf32>
    %15 = vector.shape_cast %12 : vector<8x8xf32> to vector<1x1x8x8xf32>
    tpu.vector_store %arg5[%c0_9, %c0_10, %c0_11, %c0_12], %15 {strides = array<i32>} : memref<1x1x64x8xf32, #tpu.memory_space<vmem>>, vector<1x1x8x8xf32>,
    %16 = vector.extract_strided_slice %10 {offsets = [16, 0], sizes = [16, 8], strides = [1, 1]} : vector<128x8xbf16> to vector<16x8xbf16>
    %cst_13 = arith.constant dense<0.000000e+00> : vector<8x8xf32>
    %17 = tpu.matmul %8, %16, %cst_13 {dimension_numbers = #tpu.dot_dimension_numbers<[1], [0], [0], [1], [0, 0, 1, 1], [], []>} : vector<8x16xbf16>, vector<16x8xbf16>, vector<8x8xf32> -> vector<8x8xf32>
    %c0_14 = arith.constant 0 : index
    %c0_15 = arith.constant 0 : index
    %c8 = arith.constant 8 : index
    %c0_16 = arith.constant 0 : index
    %18 = vector.load %arg5[%c0_14, %c0_15, %c8, %c0_16] : memref<1x1x64x8xf32, #tpu.memory_space<vmem>>, vector<1x1x8x8xf32>
    %19 = vector.shape_cast %18 : vector<1x1x8x8xf32> to vector<8x8xf32>
    %20 = vector.shape_cast %17 : vector<8x8xf32> to vector<1x1x8x8xf32>
    tpu.vector_store %arg5[%c0_14, %c0_15, %c8, %c0_16], %20 {strides = array<i32>} : memref<1x1x64x8xf32, #tpu.memory_space<vmem>>, vector<1x1x8x8xf32>,
    %21 = vector.extract_strided_slice %10 {offsets = [32, 0], sizes = [16, 8], strides = [1, 1]} : vector<128x8xbf16> to vector<16x8xbf16>
    %cst_17 = arith.constant dense<0.000000e+00> : vector<8x8xf32>
    %22 = tpu.matmul %8, %21, %cst_17 {dimension_numbers = #tpu.dot_dimension_numbers<[1], [0], [0], [1], [0, 0, 1, 1], [], []>} : vector<8x16xbf16>, vector<16x8xbf16>, vector<8x8xf32> -> vector<8x8xf32>
    %c0_18 = arith.constant 0 : index
    %c0_19 = arith.constant 0 : index
    %c16 = arith.constant 16 : index
    %c0_20 = arith.constant 0 : index
    %23 = vector.load %arg5[%c0_18, %c0_19, %c16, %c0_20] : memref<1x1x64x8xf32, #tpu.memory_space<vmem>>, vector<1x1x8x8xf32>
    %24 = vector.shape_cast %23 : vector<1x1x8x8xf32> to vector<8x8xf32>
    %25 = vector.shape_cast %22 : vector<8x8xf32> to vector<1x1x8x8xf32>
    tpu.vector_store %arg5[%c0_18, %c0_19, %c16, %c0_20], %25 {strides = array<i32>} : memref<1x1x64x8xf32, #tpu.memory_space<vmem>>, vector<1x1x8x8xf32>,
    %26 = vector.extract_strided_slice %10 {offsets = [48, 0], sizes = [16, 8], strides = [1, 1]} : vector<128x8xbf16> to vector<16x8xbf16>
    %cst_21 = arith.constant dense<0.000000e+00> : vector<8x8xf32>
    %27 = tpu.matmul %8, %26, %cst_21 {dimension_numbers = #tpu.dot_dimension_numbers<[1], [0], [0], [1], [0, 0, 1, 1], [], []>} : vector<8x16xbf16>, vector<16x8xbf16>, vector<8x8xf32> -> vector<8x8xf32>
    %c0_22 = arith.constant 0 : index
    %c0_23 = arith.constant 0 : index
    %c24 = arith.constant 24 : index
    %c0_24 = arith.constant 0 : index
    %28 = vector.load %arg5[%c0_22, %c0_23, %c24, %c0_24] : memref<1x1x64x8xf32, #tpu.memory_space<vmem>>, vector<1x1x8x8xf32>
    %29 = vector.shape_cast %28 : vector<1x1x8x8xf32> to vector<8x8xf32>
    %30 = vector.shape_cast %27 : vector<8x8xf32> to vector<1x1x8x8xf32>
    tpu.vector_store %arg5[%c0_22, %c0_23, %c24, %c0_24], %30 {strides = array<i32>} : memref<1x1x64x8xf32, #tpu.memory_space<vmem>>, vector<1x1x8x8xf32>,
    %31 = vector.extract_strided_slice %10 {offsets = [64, 0], sizes = [16, 8], strides = [1, 1]} : vector<128x8xbf16> to vector<16x8xbf16>
    %cst_25 = arith.constant dense<0.000000e+00> : vector<8x8xf32>
    %32 = tpu.matmul %8, %31, %cst_25 {dimension_numbers = #tpu.dot_dimension_numbers<[1], [0], [0], [1], [0, 0, 1, 1], [], []>} : vector<8x16xbf16>, vector<16x8xbf16>, vector<8x8xf32> -> vector<8x8xf32>
    %c0_26 = arith.constant 0 : index
    %c0_27 = arith.constant 0 : index
    %c32 = arith.constant 32 : index
    %c0_28 = arith.constant 0 : index
    %33 = vector.load %arg5[%c0_26, %c0_27, %c32, %c0_28] : memref<1x1x64x8xf32, #tpu.memory_space<vmem>>, vector<1x1x8x8xf32>
    %34 = vector.shape_cast %33 : vector<1x1x8x8xf32> to vector<8x8xf32>
    %35 = vector.shape_cast %32 : vector<8x8xf32> to vector<1x1x8x8xf32>
    tpu.vector_store %arg5[%c0_26, %c0_27, %c32, %c0_28], %35 {strides = array<i32>} : memref<1x1x64x8xf32, #tpu.memory_space<vmem>>, vector<1x1x8x8xf32>,
    %36 = vector.extract_strided_slice %10 {offsets = [80, 0], sizes = [16, 8], strides = [1, 1]} : vector<128x8xbf16> to vector<16x8xbf16>
    %cst_29 = arith.constant dense<0.000000e+00> : vector<8x8xf32>
    %37 = tpu.matmul %8, %36, %cst_29 {dimension_numbers = #tpu.dot_dimension_numbers<[1], [0], [0], [1], [0, 0, 1, 1], [], []>} : vector<8x16xbf16>, vector<16x8xbf16>, vector<8x8xf32> -> vector<8x8xf32>
    %c0_30 = arith.constant 0 : index
    %c0_31 = arith.constant 0 : index
    %c40 = arith.constant 40 : index
    %c0_32 = arith.constant 0 : index
    %38 = vector.load %arg5[%c0_30, %c0_31, %c40, %c0_32] : memref<1x1x64x8xf32, #tpu.memory_space<vmem>>, vector<1x1x8x8xf32>
    %39 = vector.shape_cast %38 : vector<1x1x8x8xf32> to vector<8x8xf32>
    %40 = vector.shape_cast %37 : vector<8x8xf32> to vector<1x1x8x8xf32>
    tpu.vector_store %arg5[%c0_30, %c0_31, %c40, %c0_32], %40 {strides = array<i32>} : memref<1x1x64x8xf32, #tpu.memory_space<vmem>>, vector<1x1x8x8xf32>,
    %41 = vector.extract_strided_slice %10 {offsets = [96, 0], sizes = [16, 8], strides = [1, 1]} : vector<128x8xbf16> to vector<16x8xbf16>
    %cst_33 = arith.constant dense<0.000000e+00> : vector<8x8xf32>
    %42 = tpu.matmul %8, %41, %cst_33 {dimension_numbers = #tpu.dot_dimension_numbers<[1], [0], [0], [1], [0, 0, 1, 1], [], []>} : vector<8x16xbf16>, vector<16x8xbf16>, vector<8x8xf32> -> vector<8x8xf32>
    %c0_34 = arith.constant 0 : index
    %c0_35 = arith.constant 0 : index
    %c48 = arith.constant 48 : index
    %c0_36 = arith.constant 0 : index
    %43 = vector.load %arg5[%c0_34, %c0_35, %c48, %c0_36] : memref<1x1x64x8xf32, #tpu.memory_space<vmem>>, vector<1x1x8x8xf32>
    %44 = vector.shape_cast %43 : vector<1x1x8x8xf32> to vector<8x8xf32>
    %45 = vector.shape_cast %42 : vector<8x8xf32> to vector<1x1x8x8xf32>
    tpu.vector_store %arg5[%c0_34, %c0_35, %c48, %c0_36], %45 {strides = array<i32>} : memref<1x1x64x8xf32, #tpu.memory_space<vmem>>, vector<1x1x8x8xf32>,
    %46 = vector.extract_strided_slice %10 {offsets = [112, 0], sizes = [16, 8], strides = [1, 1]} : vector<128x8xbf16> to vector<16x8xbf16>
    %cst_37 = arith.constant dense<0.000000e+00> : vector<8x8xf32>
    %47 = tpu.matmul %8, %46, %cst_37 {dimension_numbers = #tpu.dot_dimension_numbers<[1], [0], [0], [1], [0, 0, 1, 1], [], []>} : vector<8x16xbf16>, vector<16x8xbf16>, vector<8x8xf32> -> vector<8x8xf32>
    %c0_38 = arith.constant 0 : index
    %c0_39 = arith.constant 0 : index
    %c56 = arith.constant 56 : index
    %c0_40 = arith.constant 0 : index
    %48 = vector.load %arg5[%c0_38, %c0_39, %c56, %c0_40] : memref<1x1x64x8xf32, #tpu.memory_space<vmem>>, vector<1x1x8x8xf32>
    %49 = vector.shape_cast %48 : vector<1x1x8x8xf32> to vector<8x8xf32>
    %50 = vector.shape_cast %47 : vector<8x8xf32> to vector<1x1x8x8xf32>
    tpu.vector_store %arg5[%c0_38, %c0_39, %c56, %c0_40], %50 {strides = array<i32>} : memref<1x1x64x8xf32, #tpu.memory_space<vmem>>, vector<1x1x8x8xf32>,
    return
  }
  func.func @transform_0(%arg0: i32, %arg1: i32) -> (i32, i32, i32) {
    %c0_i32 = arith.constant 0 : i32
    %c0_i32_0 = arith.constant 0 : i32
    %c0_i32_1 = arith.constant 0 : i32
    return %arg0, %c0_i32, %c0_i32_0 : i32, i32, i32
  }
  func.func @transform_1(%arg0: i32, %arg1: i32) -> (i32, i32, i32) {
    %c0_i32 = arith.constant 0 : i32
    %c0_i32_0 = arith.constant 0 : i32
    %c0_i32_1 = arith.constant 0 : i32
    return %arg1, %c0_i32, %c0_i32_0 : i32, i32, i32
  }
  func.func @transform_2(%arg0: i32, %arg1: i32) -> (i32, i32, i32) {
    %c0_i32 = arith.constant 0 : i32
    %c0_i32_0 = arith.constant 0 : i32
    %c0_i32_1 = arith.constant 0 : i32
    return %arg1, %c0_i32, %c0_i32_0 : i32, i32, i32
  }
  func.func @transform_3(%arg0: i32, %arg1: i32) -> (i32, i32, i32, i32) {
    %c0_i32 = arith.constant 0 : i32
    %c0_i32_0 = arith.constant 0 : i32
    %c0_i32_1 = arith.constant 0 : i32
    return %arg1, %arg0, %c0_i32, %c0_i32_0 : i32, i32, i32, i32
  }
}

</mosaic_0001>

<llo_original>
// kernel: tpu_custom_call.1
$region0: #{tpu_custom_call.1}
  #allocation0 [shape = 'u32[]', space=smem, size = 0x4, offset = 0x4, fixed_abs, tag = 'smem constant byte address 0x4 - core index']
  #allocation1 [shape = 'u32[144,128]{1,0:T(1,128)}', space=vmem, size = 0x12000, scoped, tag = 'internal scratch']
  %s0 = inlined_call_operand.hbm [shape: f32[8,16,16], index: 0, kind: input, shape index: {}]
  %s1 = inlined_call_operand.vmem [shape: f32[2,8,16], index: 1, kind: input, shape index: {}]
  %s2 = inlined_call_operand.vmem [shape: f32[2,16,8], index: 2, kind: input, shape index: {}]
  %s3 = inlined_call_operand.vmem [shape: f32[2,1,64,8], index: 3, kind: output, shape index: {}]
  %s4 = sld [smem:[#allocation0]]
  $region49: #{tpu_custom_call.1} parent=0
    _
  %s6 = ssub.s32 1, %s4
  %s7 = scalar_select 0, %s6, %s4
  $region1: #{tpu_custom_call.1} parent=0
    #allocation2 [shape = 'u8[65536]{0}', space=vmem, size = 0x10000, scoped, tag = 'input window, operand 0, single buffered']
    #allocation3 [shape = 's32[2]{0}', space=sflag, size = 0x8, scoped, tag = 'scoped memory for tpu_custom_call.1']
    %8 = vsyncpa [#allocation3], 0
    loop: start=0, step=1, limit=4
    $region2: #{tpu_custom_call.1} parent=1 // loop_pre_header
      _
    $region3: #{tpu_custom_call.1} parent=1 // loop_header
      %s10 = sphi 0, %s14
      %p11 = scmp.ge.s32.totalorder %s10, 4
      %s17 = sphi 0, %s29
      %s18 = sphi 0, %s25
      %s19 = sphi 0, %s17
      %s20 = sphi 0, %s18
      %s21 = sphi 0, %s19
      %s22 = sphi 0, %s20
      %s32 = sphi 0, %s34
      %s35 = sphi 0, %s32
      %s36 = sphi 0, %s35
      %s52 = sphi 0, %s36
      %s58 = sphi 0, %s60
      %s61 = sphi 0, %s58
      %s62 = sphi 0, %s61
      %s78 = sphi 0, %s62
      %s84 = sphi 0, %s86
      %s87 = sphi 0, %s84
      %s88 = sphi 0, %s87
      %s104 = sphi 0, %s88
      %s112 = sphi 0, %s114
      %s115 = sphi 0, %s112
      %s116 = sphi 0, %s115
      %s132 = sphi 0, %s116
    $region4: #{tpu_custom_call.1} parent=1 // loop_header_branch
      %13 = sbr.rel (%p11) target = $region8
    $region5: #{tpu_custom_call.1} parent=1 // loop_body
      %s15 = ssub.s32 %s10, 1
      %s16 = ssub.s32 %s10, 2
      %s23 = sadd.s32 1, %s18
      %p24 = scmp.ge.s32.totalorder %s23, 2
      %s25 = scalar_select %p24, 0, %s23
      %s26 = sadd.s32 1, %s17
      %s27 = scalar_select %p24, %s26, %s17
      %p28 = scmp.ge.s32.totalorder %s27, 1
      %s29 = scalar_select %p28, 0, %s27
      %s30 = ssub.s32 %s17, %s29
      %p31 = scmp.eq.s32.totalorder %s30, 0
      %s33 = sadd.s32 %s32, 1
      %s34 = scalar_select %p31, %s32, %s33
      %p37 = pneg %p31
      %p38 = scmp.eq.s32.totalorder %s10, 1
      %p39 = por %p37, %p38
      %p40 = scmp.ne.s32.totalorder %s32, %s35
      %p41 = scmp.eq.s32.totalorder %s10, 0
      %p42 = por %p40, %p41
      %p43 = scmp.ne.s32.totalorder %s32, %s35
      %p44 = scmp.eq.s32.totalorder %s15, 1
      %p45 = por %p43, %p44
      %p46 = scmp.ne.s32.totalorder %s35, %s36
      %p47 = scmp.eq.s32.totalorder %s15, 0
      %p48 = por %p46, %p47
      %p49 = scmp.ne.s32.totalorder %s35, %s36
      %p50 = scmp.eq.s32.totalorder %s16, 1
      %p51 = por %p49, %p50
      %p53 = scmp.ne.s32.totalorder %s36, %s52
      %p54 = scmp.eq.s32.totalorder %s16, 0
      %p55 = por %p53, %p54
      %s56 = ssub.s32 %s18, %s25
      %p57 = scmp.eq.s32.totalorder %s56, 0
      %s59 = sadd.s32 %s58, 1
      %s60 = scalar_select %p57, %s58, %s59
      %p63 = pneg %p57
      %p64 = scmp.eq.s32.totalorder %s10, 1
      %p65 = por %p63, %p64
      %p66 = scmp.ne.s32.totalorder %s58, %s61
      %p67 = scmp.eq.s32.totalorder %s10, 0
      %p68 = por %p66, %p67
      %p69 = scmp.ne.s32.totalorder %s58, %s61
      %p70 = scmp.eq.s32.totalorder %s15, 1
      %p71 = por %p69, %p70
      %p72 = scmp.ne.s32.totalorder %s61, %s62
      %p73 = scmp.eq.s32.totalorder %s15, 0
      %p74 = por %p72, %p73
      %p75 = scmp.ne.s32.totalorder %s61, %s62
      %p76 = scmp.eq.s32.totalorder %s16, 1
      %p77 = por %p75, %p76
      %p79 = scmp.ne.s32.totalorder %s62, %s78
      %p80 = scmp.eq.s32.totalorder %s16, 0
      %p81 = por %p79, %p80
      %s82 = ssub.s32 %s18, %s25
      %p83 = scmp.eq.s32.totalorder %s82, 0
      %s85 = sadd.s32 %s84, 1
      %s86 = scalar_select %p83, %s84, %s85
      %p89 = pneg %p83
      %p90 = scmp.eq.s32.totalorder %s10, 1
      %p91 = por %p89, %p90
      %p92 = scmp.ne.s32.totalorder %s84, %s87
      %p93 = scmp.eq.s32.totalorder %s10, 0
      %p94 = por %p92, %p93
      %p95 = scmp.ne.s32.totalorder %s84, %s87
      %p96 = scmp.eq.s32.totalorder %s15, 1
      %p97 = por %p95, %p96
      %p98 = scmp.ne.s32.totalorder %s87, %s88
      %p99 = scmp.eq.s32.totalorder %s15, 0
      %p100 = por %p98, %p99
      %p101 = scmp.ne.s32.totalorder %s87, %s88
      %p102 = scmp.eq.s32.totalorder %s16, 1
      %p103 = por %p101, %p102
      %p105 = scmp.ne.s32.totalorder %s88, %s104
      %p106 = scmp.eq.s32.totalorder %s16, 0
      %p107 = por %p105, %p106
      %s108 = ssub.s32 %s18, %s25
      %s109 = ssub.s32 %s17, %s29
      %s110 = sor.u32 %s108, %s109
      %p111 = scmp.eq.s32.totalorder %s110, 0
      %s113 = sadd.s32 %s112, 1
      %s114 = scalar_select %p111, %s112, %s113
      %p117 = pneg %p111
      %p118 = scmp.eq.s32.totalorder %s10, 1
      %p119 = por %p117, %p118
      %p120 = scmp.ne.s32.totalorder %s112, %s115
      %p121 = scmp.eq.s32.totalorder %s10, 0
      %p122 = por %p120, %p121
      %p123 = scmp.ne.s32.totalorder %s112, %s115
      %p124 = scmp.eq.s32.totalorder %s15, 1
      %p125 = por %p123, %p124
      %p126 = scmp.ne.s32.totalorder %s115, %s116
      %p127 = scmp.eq.s32.totalorder %s15, 0
      %p128 = por %p126, %p127
      %p129 = scmp.ne.s32.totalorder %s115, %s116
      %p130 = scmp.eq.s32.totalorder %s16, 1
      %p131 = por %p129, %p130
      %p133 = scmp.ne.s32.totalorder %s116, %s132
      %p134 = scmp.eq.s32.totalorder %s16, 0
      %p135 = por %p133, %p134
      %p136 = scmp.le.s32.totalorder 1, %s10
      %p137 = scmp.lt.s32.totalorder %s10, 3
      %p138 = pnand %p136, %p137
      %p139 = pneg %p138
      // Predicated region
      $region9: #{tpu_custom_call.1} parent=5 // pred_check
        _
      $region10: #{tpu_custom_call.1} parent=5 // pred_check_branch
        %141 = sbr.rel (%p138) target = $region12
      $region11: #{tpu_custom_call.1} parent=5 // pred_region
        %s142 = ssub.s32 %s10, 1
        // Predicated region
        $region13: #{tpu_custom_call.1} parent=11 // pred_check
          %p143 = pneg %p48
        $region14: #{tpu_custom_call.1} parent=11 // pred_check_branch
          %145 = sbr.rel (%p143) target = $region16
        $region15: #{tpu_custom_call.1} parent=11 // pred_region
          %s146 = smul.u32 8, %s19
          %s148 = ssub.s32 2048, 2048
          %149 = vsyncadd [#allocation3], %s148
          %s150 = smul.addr %s146, 2
          %s151 = smul.addr %s150, 128
          %s152 = scalar_lea.hbm %s0, %s151
          %s153 = sshll.u32 [#allocation2], 4
          %s154 = int_to_ptr.vmem [resolvable:$true] %s153
          %159 = dma.hbm_to_vmem [thread:$0]  %s152, 2048, %s154, [#allocation3], 128, 128, 8
        $region16: #{tpu_custom_call.1} parent=11 // pred_fallthru
          _
      $region12: #{tpu_custom_call.1} parent=5 // pred_fallthru
        _
      %p160 = scmp.lt.s32.totalorder %s10, 2
      // Predicated region
      $region17: #{tpu_custom_call.1} parent=5 // pred_check
        %p161 = pneg %p160
      $region18: #{tpu_custom_call.1} parent=5 // pred_check_branch
        %163 = sbr.rel (%p161) target = $region20
      $region19: #{tpu_custom_call.1} parent=5 // pred_region
        // Predicated region
        $region21: #{tpu_custom_call.1} parent=19 // pred_check
          %p164 = pneg %p68
        $region22: #{tpu_custom_call.1} parent=19 // pred_check_branch
          %166 = sbr.rel (%p164) target = $region24
        $region23: #{tpu_custom_call.1} parent=19 // pred_region
          %p167 = scmp.lt.s32.totalorder %s18, 1
          %s168 = scalar_select %p167, %s18, 1
          %s169 = smul.addr %s168, 8
          %s170 = scalar_lea.vmem %s1, %s169
        $region24: #{tpu_custom_call.1} parent=19 // pred_fallthru
          _
        // Predicated region
        $region25: #{tpu_custom_call.1} parent=19 // pred_check
          %p171 = pneg %p94
        $region26: #{tpu_custom_call.1} parent=19 // pred_check_branch
          %173 = sbr.rel (%p171) target = $region28
        $region27: #{tpu_custom_call.1} parent=19 // pred_region
          %p174 = scmp.lt.s32.totalorder %s18, 1
          %s175 = scalar_select %p174, %s18, 1
          %s176 = smul.addr %s175, 2
          %s177 = smul.addr %s176, 8
          %s178 = scalar_lea.vmem %s2, %s177
        $region28: #{tpu_custom_call.1} parent=19 // pred_fallthru
          _
      $region20: #{tpu_custom_call.1} parent=5 // pred_fallthru
        _
      %p179 = scmp.le.s32.totalorder 1, %s10
      %p180 = scmp.lt.s32.totalorder %s10, 3
      %p181 = pnand %p179, %p180
      %p182 = pneg %p181
      // Predicated region
      $region29: #{tpu_custom_call.1} parent=5 // pred_check
        _
      $region30: #{tpu_custom_call.1} parent=5 // pred_check_branch
        %184 = sbr.rel (%p181) target = $region32
      $region31: #{tpu_custom_call.1} parent=5 // pred_region
        %s185 = ssub.s32 %s10, 1
        // Predicated region
        $region33: #{tpu_custom_call.1} parent=31 // pred_check
          %p186 = pneg %p48
        $region34: #{tpu_custom_call.1} parent=31 // pred_check_branch
          %188 = sbr.rel (%p186) target = $region36
        $region35: #{tpu_custom_call.1} parent=31 // pred_region
          %189 = dma.done [#allocation3], 2048
        $region36: #{tpu_custom_call.1} parent=31 // pred_fallthru
          _
        %p190 = pneg %p48
        %p191 = pneg %p45
        %p192 = scmp.lt.s32.totalorder %s20, 1
        %s193 = scalar_select %p192, %s20, 1
        %s194 = smul.addr %s193, 8
        %s195 = scalar_lea.vmem %s1, %s194
        %p196 = pneg %p74
        %p197 = pneg %p71
        %p198 = scmp.lt.s32.totalorder %s20, 1
        %s199 = scalar_select %p198, %s20, 1
        %s200 = smul.addr %s199, 2
        %s201 = smul.addr %s200, 8
        %s202 = scalar_lea.vmem %s2, %s201
        %p203 = pneg %p100
        %p204 = pneg %p97
        %p205 = pneg %p128
        %p206 = pneg %p125
        %p207 = scmp.lt.s32.totalorder %s20, 1
        %s208 = scalar_select %p207, %s20, 1
        %p209 = scmp.lt.s32.totalorder %s19, 0
        %s210 = scalar_select %p209, %s19, 0
        %s211 = smul.addr %s210, 8
        %s212 = smul.addr %s208, 8
        %s213 = sadd.s32 %s211, %s212
        %s214 = smul.addr %s213, 8
        %s215 = scalar_lea.vmem %s3, %s214
        %s216 = smul.u32 8, %s19
        %p217 = scmp.lt.s32.totalorder %s20, 1
        %s218 = scalar_select %p217, %s20, 1
        %s219 = smul.addr %s218, 8
        %s220 = scalar_lea.vmem %s1, %s219
        %p221 = scmp.lt.s32.totalorder %s20, 1
        %s222 = scalar_select %p221, %s20, 1
        %s223 = smul.addr %s222, 2
        %s224 = smul.addr %s223, 8
        %s225 = scalar_lea.vmem %s2, %s224
        %p226 = scmp.lt.s32.totalorder %s20, 1
        %s227 = scalar_select %p226, %s20, 1
        %p228 = scmp.lt.s32.totalorder %s19, 0
        %s229 = scalar_select %p228, %s19, 0
        %s230 = smul.addr %s229, 8
        %s231 = smul.addr %s227, 8
        %s232 = sadd.s32 %s230, %s231
        %s233 = smul.addr %s232, 8
        %s234 = scalar_lea.vmem %s3, %s233
        %v236 = vld [vmem:[#allocation2] sm:$0xff]
        %v237 = vld [vmem:[#allocation2 + $0x8] sm:$0xff]
        %v238 = vld [vmem:[#allocation2 + $0x10] sm:$0xff]
        %v239 = vld [vmem:[#allocation2 + $0x18] sm:$0xff]
        %v240 = vld [vmem:[#allocation2 + $0x20] sm:$0xff]
        %v241 = vld [vmem:[#allocation2 + $0x28] sm:$0xff]
        %v242 = vld [vmem:[#allocation2 + $0x30] sm:$0xff]
        %v243 = vld [vmem:[#allocation2 + $0x38] sm:$0xff]
        %v244 = vld [vmem:[#allocation2 + $0x40] sm:$0xff]
        %v245 = vld [vmem:[#allocation2 + $0x48] sm:$0xff]
        %v246 = vld [vmem:[#allocation2 + $0x50] sm:$0xff]
        %v247 = vld [vmem:[#allocation2 + $0x58] sm:$0xff]
        %v248 = vld [vmem:[#allocation2 + $0x60] sm:$0xff]
        %v249 = vld [vmem:[#allocation2 + $0x68] sm:$0xff]
        %v250 = vld [vmem:[#allocation2 + $0x70] sm:$0xff]
        %v251 = vld [vmem:[#allocation2 + $0x78] sm:$0xff]
        %v252 = vpack.c.bf16 %v237, %v236
        %v253 = vpack.c.bf16 %v239, %v238
        %v254 = vpack.c.bf16 %v241, %v240
        %v255 = vpack.c.bf16 %v243, %v242
        %v256 = vpack.c.bf16 %v245, %v244
        %v257 = vpack.c.bf16 %v247, %v246
        %v258 = vpack.c.bf16 %v249, %v248
        %v259 = vpack.c.bf16 %v251, %v250
        %v260 = vld [vmem:[%s225] sm:$0xff]
        %v261 = vld [vmem:[%s225 + $0x8] sm:$0xff]
        %v262 = vpack.c.bf16 %v261, %v260
        %v263 = vld [vmem:[%s220] sm:$0xff]
        %v264 = vpack.c.bf16 %v263, %v263
        %vm265 = vcmask 130048
        %v267 = vsel %vm265, %v252, 0
        %v270 = vsel %vm265, %v253, 0
        %v273 = vsel %vm265, %v254, 0
        %v276 = vsel %vm265, %v255, 0
        %v279 = vsel %vm265, %v256, 0
        %v282 = vsel %vm265, %v257, 0
        %v285 = vsel %vm265, %v258, 0
        %v288 = vsel %vm265, %v259, 0
        %290 = vmatprep.subr.bf16.mxu0 0
        %291 = vmatpush1.bf16.msra.mxu0 %v262
        %292 = vmatprep.subr.bf16.mxu0 0
        %293 = vmatpush1.bf16.msra.mxu0 0
        %294 = vmatprep.subr.bf16.mxu0 0
        %295 = vmatpush1.bf16.msra.mxu0 0
        %296 = vmatprep.subr.bf16.mxu0 0
        %297 = vmatpush1.bf16.msra.mxu0 0
        %298 = vmatprep.subr.bf16.mxu0 0
        %299 = vmatpush1.bf16.msra.mxu0 0
        %300 = vmatprep.subr.bf16.mxu0 0
        %301 = vmatpush1.bf16.msra.mxu0 0
        %302 = vmatprep.subr.bf16.mxu0 0
        %303 = vmatpush1.bf16.msra.mxu0 0
        %304 = vmatprep.subr.bf16.mxu0 0
        %305 = vmatpush1.bf16.msra.mxu0 0
        %306 = vmatprep.subr.bf16.mxu0 0
        %307 = vmatpush1.bf16.msra.mxu0 0
        %308 = vmatprep.subr.bf16.mxu0 0
        %309 = vmatpush1.bf16.msra.mxu0 0
        %310 = vmatprep.subr.bf16.mxu0 0
        %311 = vmatpush1.bf16.msra.mxu0 0
        %312 = vmatprep.subr.bf16.mxu0 0
        %313 = vmatpush1.bf16.msra.mxu0 0
        %314 = vmatprep.subr.bf16.mxu0 0
        %315 = vmatpush1.bf16.msra.mxu0 0
        %316 = vmatprep.subr.bf16.mxu0 0
        %317 = vmatpush1.bf16.msra.mxu0 0
        %318 = vmatprep.subr.bf16.mxu0 0
        %319 = vmatpush1.bf16.msra.mxu0 0
        %320 = vmatprep.subr.bf16.mxu0 0
        %321 = vmatpush1.bf16.msra.mxu0 0
        %322 = vmatprep.mubr.bf16.mxu0 0
        %323 = vmatmul.mubr.bf16.gmra.mrb[0].mxu0 %v267
        %v324 = vpop.f32.mrb[0].mxu0
        %v325 = vadd.f32 0.0, %v324
        %v326 = vpop.f32.mrb[0].mxu0
        %v327 = vpop.f32.mrb[0].mxu0
        %v328 = vadd.f32 0.0, %v327
        %v329 = vpop.f32.mrb[0].mxu0
        %330 = vmatprep.mubr.bf16.mxu0 0
        %331 = vmatmul.mubr.bf16.gmra.mrb[0].mxu0 %v270
        %v332 = vpop.f32.mrb[0].mxu0
        %v333 = vadd.f32 0.0, %v332
        %v334 = vpop.f32.mrb[0].mxu0
        %v335 = vpop.f32.mrb[0].mxu0
        %v336 = vadd.f32 0.0, %v335
        %v337 = vpop.f32.mrb[0].mxu0
        %338 = vmatprep.mubr.bf16.mxu0 0
        %339 = vmatmul.mubr.bf16.gmra.mrb[0].mxu0 %v273
        %v340 = vpop.f32.mrb[0].mxu0
        %v341 = vadd.f32 0.0, %v340
        %v342 = vpop.f32.mrb[0].mxu0
        %v343 = vpop.f32.mrb[0].mxu0
        %v344 = vadd.f32 0.0, %v343
        %v345 = vpop.f32.mrb[0].mxu0
        %346 = vmatprep.mubr.bf16.mxu0 0
        %347 = vmatmul.mubr.bf16.gmra.mrb[0].mxu0 %v276
        %v348 = vpop.f32.mrb[0].mxu0
        %v349 = vadd.f32 0.0, %v348
        %v350 = vpop.f32.mrb[0].mxu0
        %v351 = vpop.f32.mrb[0].mxu0
        %v352 = vadd.f32 0.0, %v351
        %v353 = vpop.f32.mrb[0].mxu0
        %354 = vmatprep.mubr.bf16.mxu0 0
        %355 = vmatmul.mubr.bf16.gmra.mrb[0].mxu0 %v279
        %v356 = vpop.f32.mrb[0].mxu0
        %v357 = vadd.f32 0.0, %v356
        %v358 = vpop.f32.mrb[0].mxu0
        %v359 = vpop.f32.mrb[0].mxu0
        %v360 = vadd.f32 0.0, %v359
        %v361 = vpop.f32.mrb[0].mxu0
        %362 = vmatprep.mubr.bf16.mxu0 0
        %363 = vmatmul.mubr.bf16.gmra.mrb[0].mxu0 %v282
        %v364 = vpop.f32.mrb[0].mxu0
        %v365 = vadd.f32 0.0, %v364
        %v366 = vpop.f32.mrb[0].mxu0
        %v367 = vpop.f32.mrb[0].mxu0
        %v368 = vadd.f32 0.0, %v367
        %v369 = vpop.f32.mrb[0].mxu0
        %370 = vmatprep.mubr.bf16.mxu0 0
        %371 = vmatmul.mubr.bf16.gmra.mrb[0].mxu0 %v285
        %v372 = vpop.f32.mrb[0].mxu0
        %v373 = vadd.f32 0.0, %v372
        %v374 = vpop.f32.mrb[0].mxu0
        %v375 = vpop.f32.mrb[0].mxu0
        %v376 = vadd.f32 0.0, %v375
        %v377 = vpop.f32.mrb[0].mxu0
        %378 = vmatprep.mubr.bf16.mxu0 0
        %379 = vmatmul.mubr.bf16.gmra.mrb[0].mxu0 %v288
        %v380 = vpop.f32.mrb[0].mxu0
        %v381 = vadd.f32 0.0, %v380
        %v382 = vpop.f32.mrb[0].mxu0
        %v383 = vpop.f32.mrb[0].mxu0
        %v384 = vadd.f32 0.0, %v383
        %v385 = vpop.f32.mrb[0].mxu0
        %386 = vdwg.mxu0
        %v387 = vpack.c.bf16 %v328, %v325
        %v388 = vpack.c.bf16 %v336, %v333
        %v389 = vpack.c.bf16 %v344, %v341
        %v390 = vpack.c.bf16 %v352, %v349
        %v391 = vpack.c.bf16 %v360, %v357
        %v392 = vpack.c.bf16 %v368, %v365
        %v393 = vpack.c.bf16 %v376, %v373
        %v394 = vpack.c.bf16 %v384, %v381
        %v396 = vsel %vm265, %v264, 0
        %398 = vmatprep.subr.bf16.mxu0 0
        %399 = vmatpush1.bf16.msra.mxu0 %v387
        %400 = vmatprep.subr.bf16.mxu0 0
        %401 = vmatpush1.bf16.msra.mxu0 0
        %402 = vmatprep.subr.bf16.mxu0 0
        %403 = vmatpush1.bf16.msra.mxu0 0
        %404 = vmatprep.subr.bf16.mxu0 0
        %405 = vmatpush1.bf16.msra.mxu0 0
        %406 = vmatprep.subr.bf16.mxu0 0
        %407 = vmatpush1.bf16.msra.mxu0 0
        %408 = vmatprep.subr.bf16.mxu0 0
        %409 = vmatpush1.bf16.msra.mxu0 0
        %410 = vmatprep.subr.bf16.mxu0 0
        %411 = vmatpush1.bf16.msra.mxu0 0
        %412 = vmatprep.subr.bf16.mxu0 0
        %413 = vmatpush1.bf16.msra.mxu0 0
        %414 = vmatprep.subr.bf16.mxu0 0
        %415 = vmatpush1.bf16.msra.mxu0 0
        %416 = vmatprep.subr.bf16.mxu0 0
        %417 = vmatpush1.bf16.msra.mxu0 0
        %418 = vmatprep.subr.bf16.mxu0 0
        %419 = vmatpush1.bf16.msra.mxu0 0
        %420 = vmatprep.subr.bf16.mxu0 0
        %421 = vmatpush1.bf16.msra.mxu0 0
        %422 = vmatprep.subr.bf16.mxu0 0
        %423 = vmatpush1.bf16.msra.mxu0 0
        %424 = vmatprep.subr.bf16.mxu0 0
        %425 = vmatpush1.bf16.msra.mxu0 0
        %426 = vmatprep.subr.bf16.mxu0 0
        %427 = vmatpush1.bf16.msra.mxu0 0
        %428 = vmatprep.subr.bf16.mxu0 0
        %429 = vmatpush1.bf16.msra.mxu0 0
        %430 = vmatprep.mubr.bf16.mxu0 0
        %431 = vmatmul.mubr.bf16.gmra.mrb[0].mxu0 %v396
        %v432 = vpop.f32.mrb[0].mxu0
        %v433 = vadd.f32 0.0, %v432
        %v434 = vpop.f32.mrb[0].mxu0
        %v435 = vpop.f32.mrb[0].mxu0
        %v436 = vpop.f32.mrb[0].mxu0
        %437 = vdwg.mxu0
        %vm438 = vcmask 64512
        %439 = vst.msk [vmem:[%s234] sm:$0xff] %vm438, %v433
        %440 = vmatprep.subr.bf16.mxu0 0
        %441 = vmatpush1.bf16.msra.mxu0 %v388
        %442 = vmatprep.subr.bf16.mxu0 0
        %443 = vmatpush1.bf16.msra.mxu0 0
        %444 = vmatprep.subr.bf16.mxu0 0
        %445 = vmatpush1.bf16.msra.mxu0 0
        %446 = vmatprep.subr.bf16.mxu0 0
        %447 = vmatpush1.bf16.msra.mxu0 0
        %448 = vmatprep.subr.bf16.mxu0 0
        %449 = vmatpush1.bf16.msra.mxu0 0
        %450 = vmatprep.subr.bf16.mxu0 0
        %451 = vmatpush1.bf16.msra.mxu0 0
        %452 = vmatprep.subr.bf16.mxu0 0
        %453 = vmatpush1.bf16.msra.mxu0 0
        %454 = vmatprep.subr.bf16.mxu0 0
        %455 = vmatpush1.bf16.msra.mxu0 0
        %456 = vmatprep.subr.bf16.mxu0 0
        %457 = vmatpush1.bf16.msra.mxu0 0
        %458 = vmatprep.subr.bf16.mxu0 0
        %459 = vmatpush1.bf16.msra.mxu0 0
        %460 = vmatprep.subr.bf16.mxu0 0
        %461 = vmatpush1.bf16.msra.mxu0 0
        %462 = vmatprep.subr.bf16.mxu0 0
        %463 = vmatpush1.bf16.msra.mxu0 0
        %464 = vmatprep.subr.bf16.mxu0 0
        %465 = vmatpush1.bf16.msra.mxu0 0
        %466 = vmatprep.subr.bf16.mxu0 0
        %467 = vmatpush1.bf16.msra.mxu0 0
        %468 = vmatprep.subr.bf16.mxu0 0
        %469 = vmatpush1.bf16.msra.mxu0 0
        %470 = vmatprep.subr.bf16.mxu0 0
        %471 = vmatpush1.bf16.msra.mxu0 0
        %472 = vmatprep.mubr.bf16.mxu0 0
        %473 = vmatmul.mubr.bf16.gmra.mrb[0].mxu0 %v396
        %v474 = vpop.f32.mrb[0].mxu0
        %v475 = vadd.f32 0.0, %v474
        %v476 = vpop.f32.mrb[0].mxu0
        %v477 = vpop.f32.mrb[0].mxu0
        %v478 = vpop.f32.mrb[0].mxu0
        %479 = vdwg.mxu0
        %480 = vst.msk [vmem:[%s234 + $0x8] sm:$0xff] %vm438, %v475
        %481 = vmatprep.subr.bf16.mxu0 0
        %482 = vmatpush1.bf16.msra.mxu0 %v389
        %483 = vmatprep.subr.bf16.mxu0 0
        %484 = vmatpush1.bf16.msra.mxu0 0
        %485 = vmatprep.subr.bf16.mxu0 0
        %486 = vmatpush1.bf16.msra.mxu0 0
        %487 = vmatprep.subr.bf16.mxu0 0
        %488 = vmatpush1.bf16.msra.mxu0 0
        %489 = vmatprep.subr.bf16.mxu0 0
        %490 = vmatpush1.bf16.msra.mxu0 0
        %491 = vmatprep.subr.bf16.mxu0 0
        %492 = vmatpush1.bf16.msra.mxu0 0
        %493 = vmatprep.subr.bf16.mxu0 0
        %494 = vmatpush1.bf16.msra.mxu0 0
        %495 = vmatprep.subr.bf16.mxu0 0
        %496 = vmatpush1.bf16.msra.mxu0 0
        %497 = vmatprep.subr.bf16.mxu0 0
        %498 = vmatpush1.bf16.msra.mxu0 0
        %499 = vmatprep.subr.bf16.mxu0 0
        %500 = vmatpush1.bf16.msra.mxu0 0
        %501 = vmatprep.subr.bf16.mxu0 0
        %502 = vmatpush1.bf16.msra.mxu0 0
        %503 = vmatprep.subr.bf16.mxu0 0
        %504 = vmatpush1.bf16.msra.mxu0 0
        %505 = vmatprep.subr.bf16.mxu0 0
        %506 = vmatpush1.bf16.msra.mxu0 0
        %507 = vmatprep.subr.bf16.mxu0 0
        %508 = vmatpush1.bf16.msra.mxu0 0
        %509 = vmatprep.subr.bf16.mxu0 0
        %510 = vmatpush1.bf16.msra.mxu0 0
        %511 = vmatprep.subr.bf16.mxu0 0
        %512 = vmatpush1.bf16.msra.mxu0 0
        %513 = vmatprep.mubr.bf16.mxu0 0
        %514 = vmatmul.mubr.bf16.gmra.mrb[0].mxu0 %v396
        %v515 = vpop.f32.mrb[0].mxu0
        %v516 = vadd.f32 0.0, %v515
        %v517 = vpop.f32.mrb[0].mxu0
        %v518 = vpop.f32.mrb[0].mxu0
        %v519 = vpop.f32.mrb[0].mxu0
        %520 = vdwg.mxu0
        %521 = vst.msk [vmem:[%s234 + $0x10] sm:$0xff] %vm438, %v516
        %522 = vmatprep.subr.bf16.mxu0 0
        %523 = vmatpush1.bf16.msra.mxu0 %v390
        %524 = vmatprep.subr.bf16.mxu0 0
        %525 = vmatpush1.bf16.msra.mxu0 0
        %526 = vmatprep.subr.bf16.mxu0 0
        %527 = vmatpush1.bf16.msra.mxu0 0
        %528 = vmatprep.subr.bf16.mxu0 0
        %529 = vmatpush1.bf16.msra.mxu0 0
        %530 = vmatprep.subr.bf16.mxu0 0
        %531 = vmatpush1.bf16.msra.mxu0 0
        %532 = vmatprep.subr.bf16.mxu0 0
        %533 = vmatpush1.bf16.msra.mxu0 0
        %534 = vmatprep.subr.bf16.mxu0 0
        %535 = vmatpush1.bf16.msra.mxu0 0
        %536 = vmatprep.subr.bf16.mxu0 0
        %537 = vmatpush1.bf16.msra.mxu0 0
        %538 = vmatprep.subr.bf16.mxu0 0
        %539 = vmatpush1.bf16.msra.mxu0 0
        %540 = vmatprep.subr.bf16.mxu0 0
        %541 = vmatpush1.bf16.msra.mxu0 0
        %542 = vmatprep.subr.bf16.mxu0 0
        %543 = vmatpush1.bf16.msra.mxu0 0
        %544 = vmatprep.subr.bf16.mxu0 0
        %545 = vmatpush1.bf16.msra.mxu0 0
        %546 = vmatprep.subr.bf16.mxu0 0
        %547 = vmatpush1.bf16.msra.mxu0 0
        %548 = vmatprep.subr.bf16.mxu0 0
        %549 = vmatpush1.bf16.msra.mxu0 0
        %550 = vmatprep.subr.bf16.mxu0 0
        %551 = vmatpush1.bf16.msra.mxu0 0
        %552 = vmatprep.subr.bf16.mxu0 0
        %553 = vmatpush1.bf16.msra.mxu0 0
        %554 = vmatprep.mubr.bf16.mxu0 0
        %555 = vmatmul.mubr.bf16.gmra.mrb[0].mxu0 %v396
        %v556 = vpop.f32.mrb[0].mxu0
        %v557 = vadd.f32 0.0, %v556
        %v558 = vpop.f32.mrb[0].mxu0
        %v559 = vpop.f32.mrb[0].mxu0
        %v560 = vpop.f32.mrb[0].mxu0
        %561 = vdwg.mxu0
        %562 = vst.msk [vmem:[%s234 + $0x18] sm:$0xff] %vm438, %v557
        %563 = vmatprep.subr.bf16.mxu0 0
        %564 = vmatpush1.bf16.msra.mxu0 %v391
        %565 = vmatprep.subr.bf16.mxu0 0
        %566 = vmatpush1.bf16.msra.mxu0 0
        %567 = vmatprep.subr.bf16.mxu0 0
        %568 = vmatpush1.bf16.msra.mxu0 0
        %569 = vmatprep.subr.bf16.mxu0 0
        %570 = vmatpush1.bf16.msra.mxu0 0
        %571 = vmatprep.subr.bf16.mxu0 0
        %572 = vmatpush1.bf16.msra.mxu0 0
        %573 = vmatprep.subr.bf16.mxu0 0
        %574 = vmatpush1.bf16.msra.mxu0 0
        %575 = vmatprep.subr.bf16.mxu0 0
        %576 = vmatpush1.bf16.msra.mxu0 0
        %577 = vmatprep.subr.bf16.mxu0 0
        %578 = vmatpush1.bf16.msra.mxu0 0
        %579 = vmatprep.subr.bf16.mxu0 0
        %580 = vmatpush1.bf16.msra.mxu0 0
        %581 = vmatprep.subr.bf16.mxu0 0
        %582 = vmatpush1.bf16.msra.mxu0 0
        %583 = vmatprep.subr.bf16.mxu0 0
        %584 = vmatpush1.bf16.msra.mxu0 0
        %585 = vmatprep.subr.bf16.mxu0 0
        %586 = vmatpush1.bf16.msra.mxu0 0
        %587 = vmatprep.subr.bf16.mxu0 0
        %588 = vmatpush1.bf16.msra.mxu0 0
        %589 = vmatprep.subr.bf16.mxu0 0
        %590 = vmatpush1.bf16.msra.mxu0 0
        %591 = vmatprep.subr.bf16.mxu0 0
        %592 = vmatpush1.bf16.msra.mxu0 0
        %593 = vmatprep.subr.bf16.mxu0 0
        %594 = vmatpush1.bf16.msra.mxu0 0
        %595 = vmatprep.mubr.bf16.mxu0 0
        %596 = vmatmul.mubr.bf16.gmra.mrb[0].mxu0 %v396
        %v597 = vpop.f32.mrb[0].mxu0
        %v598 = vadd.f32 0.0, %v597
        %v599 = vpop.f32.mrb[0].mxu0
        %v600 = vpop.f32.mrb[0].mxu0
        %v601 = vpop.f32.mrb[0].mxu0
        %602 = vdwg.mxu0
        %603 = vst.msk [vmem:[%s234 + $0x20] sm:$0xff] %vm438, %v598
        %604 = vmatprep.subr.bf16.mxu0 0
        %605 = vmatpush1.bf16.msra.mxu0 %v392
        %606 = vmatprep.subr.bf16.mxu0 0
        %607 = vmatpush1.bf16.msra.mxu0 0
        %608 = vmatprep.subr.bf16.mxu0 0
        %609 = vmatpush1.bf16.msra.mxu0 0
        %610 = vmatprep.subr.bf16.mxu0 0
        %611 = vmatpush1.bf16.msra.mxu0 0
        %612 = vmatprep.subr.bf16.mxu0 0
        %613 = vmatpush1.bf16.msra.mxu0 0
        %614 = vmatprep.subr.bf16.mxu0 0
        %615 = vmatpush1.bf16.msra.mxu0 0
        %616 = vmatprep.subr.bf16.mxu0 0
        %617 = vmatpush1.bf16.msra.mxu0 0
        %618 = vmatprep.subr.bf16.mxu0 0
        %619 = vmatpush1.bf16.msra.mxu0 0
        %620 = vmatprep.subr.bf16.mxu0 0
        %621 = vmatpush1.bf16.msra.mxu0 0
        %622 = vmatprep.subr.bf16.mxu0 0
        %623 = vmatpush1.bf16.msra.mxu0 0
        %624 = vmatprep.subr.bf16.mxu0 0
        %625 = vmatpush1.bf16.msra.mxu0 0
        %626 = vmatprep.subr.bf16.mxu0 0
        %627 = vmatpush1.bf16.msra.mxu0 0
        %628 = vmatprep.subr.bf16.mxu0 0
        %629 = vmatpush1.bf16.msra.mxu0 0
        %630 = vmatprep.subr.bf16.mxu0 0
        %631 = vmatpush1.bf16.msra.mxu0 0
        %632 = vmatprep.subr.bf16.mxu0 0
        %633 = vmatpush1.bf16.msra.mxu0 0
        %634 = vmatprep.subr.bf16.mxu0 0
        %635 = vmatpush1.bf16.msra.mxu0 0
        %636 = vmatprep.mubr.bf16.mxu0 0
        %637 = vmatmul.mubr.bf16.gmra.mrb[0].mxu0 %v396
        %v638 = vpop.f32.mrb[0].mxu0
        %v639 = vadd.f32 0.0, %v638
        %v640 = vpop.f32.mrb[0].mxu0
        %v641 = vpop.f32.mrb[0].mxu0
        %v642 = vpop.f32.mrb[0].mxu0
        %643 = vdwg.mxu0
        %644 = vst.msk [vmem:[%s234 + $0x28] sm:$0xff] %vm438, %v639
        %645 = vmatprep.subr.bf16.mxu0 0
        %646 = vmatpush1.bf16.msra.mxu0 %v393
        %647 = vmatprep.subr.bf16.mxu0 0
        %648 = vmatpush1.bf16.msra.mxu0 0
        %649 = vmatprep.subr.bf16.mxu0 0
        %650 = vmatpush1.bf16.msra.mxu0 0
        %651 = vmatprep.subr.bf16.mxu0 0
        %652 = vmatpush1.bf16.msra.mxu0 0
        %653 = vmatprep.subr.bf16.mxu0 0
        %654 = vmatpush1.bf16.msra.mxu0 0
        %655 = vmatprep.subr.bf16.mxu0 0
        %656 = vmatpush1.bf16.msra.mxu0 0
        %657 = vmatprep.subr.bf16.mxu0 0
        %658 = vmatpush1.bf16.msra.mxu0 0
        %659 = vmatprep.subr.bf16.mxu0 0
        %660 = vmatpush1.bf16.msra.mxu0 0
        %661 = vmatprep.subr.bf16.mxu0 0
        %662 = vmatpush1.bf16.msra.mxu0 0
        %663 = vmatprep.subr.bf16.mxu0 0
        %664 = vmatpush1.bf16.msra.mxu0 0
        %665 = vmatprep.subr.bf16.mxu0 0
        %666 = vmatpush1.bf16.msra.mxu0 0
        %667 = vmatprep.subr.bf16.mxu0 0
        %668 = vmatpush1.bf16.msra.mxu0 0
        %669 = vmatprep.subr.bf16.mxu0 0
        %670 = vmatpush1.bf16.msra.mxu0 0
        %671 = vmatprep.subr.bf16.mxu0 0
        %672 = vmatpush1.bf16.msra.mxu0 0
        %673 = vmatprep.subr.bf16.mxu0 0
        %674 = vmatpush1.bf16.msra.mxu0 0
        %675 = vmatprep.subr.bf16.mxu0 0
        %676 = vmatpush1.bf16.msra.mxu0 0
        %677 = vmatprep.mubr.bf16.mxu0 0
        %678 = vmatmul.mubr.bf16.gmra.mrb[0].mxu0 %v396
        %v679 = vpop.f32.mrb[0].mxu0
        %v680 = vadd.f32 0.0, %v679
        %v681 = vpop.f32.mrb[0].mxu0
        %v682 = vpop.f32.mrb[0].mxu0
        %v683 = vpop.f32.mrb[0].mxu0
        %684 = vdwg.mxu0
        %685 = vst.msk [vmem:[%s234 + $0x30] sm:$0xff] %vm438, %v680
        %686 = vmatprep.subr.bf16.mxu0 0
        %687 = vmatpush1.bf16.msra.mxu0 %v394
        %688 = vmatprep.subr.bf16.mxu0 0
        %689 = vmatpush1.bf16.msra.mxu0 0
        %690 = vmatprep.subr.bf16.mxu0 0
        %691 = vmatpush1.bf16.msra.mxu0 0
        %692 = vmatprep.subr.bf16.mxu0 0
        %693 = vmatpush1.bf16.msra.mxu0 0
        %694 = vmatprep.subr.bf16.mxu0 0
        %695 = vmatpush1.bf16.msra.mxu0 0
        %696 = vmatprep.subr.bf16.mxu0 0
        %697 = vmatpush1.bf16.msra.mxu0 0
        %698 = vmatprep.subr.bf16.mxu0 0
        %699 = vmatpush1.bf16.msra.mxu0 0
        %700 = vmatprep.subr.bf16.mxu0 0
        %701 = vmatpush1.bf16.msra.mxu0 0
        %702 = vmatprep.subr.bf16.mxu0 0
        %703 = vmatpush1.bf16.msra.mxu0 0
        %704 = vmatprep.subr.bf16.mxu0 0
        %705 = vmatpush1.bf16.msra.mxu0 0
        %706 = vmatprep.subr.bf16.mxu0 0
        %707 = vmatpush1.bf16.msra.mxu0 0
        %708 = vmatprep.subr.bf16.mxu0 0
        %709 = vmatpush1.bf16.msra.mxu0 0
        %710 = vmatprep.subr.bf16.mxu0 0
        %711 = vmatpush1.bf16.msra.mxu0 0
        %712 = vmatprep.subr.bf16.mxu0 0
        %713 = vmatpush1.bf16.msra.mxu0 0
        %714 = vmatprep.subr.bf16.mxu0 0
        %715 = vmatpush1.bf16.msra.mxu0 0
        %716 = vmatprep.subr.bf16.mxu0 0
        %717 = vmatpush1.bf16.msra.mxu0 0
        %718 = vmatprep.mubr.bf16.mxu0 0
        %719 = vmatmul.mubr.bf16.gmra.mrb[0].mxu0 %v396
        %v720 = vpop.f32.mrb[0].mxu0
        %v721 = vadd.f32 0.0, %v720
        %v722 = vpop.f32.mrb[0].mxu0
        %v723 = vpop.f32.mrb[0].mxu0
        %v724 = vpop.f32.mrb[0].mxu0
        %725 = vdwg.mxu0
        %726 = vst.msk [vmem:[%s234 + $0x38] sm:$0xff] %vm438, %v721
        %p727 = scmp.lt.s32.totalorder %s20, 1
        %s728 = scalar_select %p727, %s20, 1
        %p729 = scmp.lt.s32.totalorder %s19, 0
        %s730 = scalar_select %p729, %s19, 0
        %s731 = smul.addr %s730, 8
        %s732 = smul.addr %s728, 8
        %s733 = sadd.s32 %s731, %s732
        %s734 = smul.addr %s733, 8
        %s735 = scalar_lea.vmem %s3, %s734
        // Predicated region
        $region37: #{tpu_custom_call.1} parent=31 // pred_check
          %p736 = pneg %p125
        $region38: #{tpu_custom_call.1} parent=31 // pred_check_branch
          %738 = sbr.rel (%p736) target = $region40
        $region39: #{tpu_custom_call.1} parent=31 // pred_region
          _
        $region40: #{tpu_custom_call.1} parent=31 // pred_fallthru
          _
      $region32: #{tpu_custom_call.1} parent=5 // pred_fallthru
        _
      %p739 = scmp.le.s32.totalorder 2, %s10
      // Predicated region
      $region41: #{tpu_custom_call.1} parent=5 // pred_check
        %p740 = pneg %p739
      $region42: #{tpu_custom_call.1} parent=5 // pred_check_branch
        %742 = sbr.rel (%p740) target = $region44
      $region43: #{tpu_custom_call.1} parent=5 // pred_region
        %s743 = ssub.s32 %s10, 2
        // Predicated region
        $region45: #{tpu_custom_call.1} parent=43 // pred_check
          %p744 = pneg %p131
        $region46: #{tpu_custom_call.1} parent=43 // pred_check_branch
          %746 = sbr.rel (%p744) target = $region48
        $region47: #{tpu_custom_call.1} parent=43 // pred_region
          %p747 = scmp.lt.s32.totalorder %s22, 1
          %s748 = scalar_select %p747, %s22, 1
          %p749 = scmp.lt.s32.totalorder %s21, 0
          %s750 = scalar_select %p749, %s21, 0
          %s751 = smul.addr %s750, 8
          %s752 = smul.addr %s748, 8
          %s753 = sadd.s32 %s751, %s752
          %s754 = smul.addr %s753, 8
          %s755 = scalar_lea.vmem %s3, %s754
        $region48: #{tpu_custom_call.1} parent=43 // pred_fallthru
          _
      $region44: #{tpu_custom_call.1} parent=5 // pred_fallthru
        _
    $region6: #{tpu_custom_call.1} parent=1 // loop_footer
      %s14 = sadd.s32 1, %s10
    $region7: #{tpu_custom_call.1} parent=1 // loop_footer_branch
      %9 = sbr.rel target = $region3
    $region8: #{tpu_custom_call.1} parent=1 // loop_exit
      _
    %756 = vsyncpa [#allocation3], 1
    %s757 = scalar_lea.sflag [#allocation3], 1
    %758 = vsyncpa %s757, 1

</llo_original>
